<compile_context>
chip_gen: v5e
topology: v5e:2x2
jax: 0.10.0
libtpu: 0.0.40
codegen_flags: <defaults>
</compile_context>

<pallas_src>
import functools

import jax
import jax.numpy as jnp
from jax import lax
from jax.experimental import pallas as pl
from jax.experimental.pallas import tpu as pltpu

_LANE = 128
_MIB = 1024 * 1024


def _round_up(x, m):
    return (x + m - 1) // m * m


def _divisor_tiles(total, unit=_LANE):
    """Multiples of `unit` that evenly divide `total`, descending."""
    return [t for t in range(total, unit - 1, -unit) if total % t == 0]


def _vmem_budget_bytes():
    """~85% of per-TensorCore VMEM (64 MiB on v7x, 128 MiB on v5e/v6e)."""
    cap = 64 * _MIB  # conservative default if the query is unavailable
    try:
        cap = int(pltpu.get_tpu_info().vmem_capacity_bytes)
    except Exception:
        pass
    return int(cap * 0.85)


def _estimate_vmem(tm, tk, tn, h_p, itm, out_itm, num_i, num_j, num_k):
    """Per-grid-step VMEM footprint, honoring single vs. double buffering."""
    def bufs(is_const):
        return 1 if is_const else 2

    x_b = bufs(num_i == 1 and num_k == 1) * tm * tk * itm
    w1_b = bufs(num_k == 1) * h_p * tk * itm
    b1_b = h_p * 4                                   # f32, single-buffered
    w2_b = bufs(num_j == 1) * tn * h_p * itm
    b2_b = bufs(num_j == 1) * tn * 4
    o_b = 2 * tm * tn * out_itm                      # output double-buffered
    acc_b = tm * h_p * 4                             # f32 hidden accumulator
    return x_b + w1_b + b1_b + w2_b + b2_b + o_b + acc_b


def _select_tiles(batch, in_p, h_p, out_p, itm, out_itm, pack, budget):
    """Largest (TM, TK, TN) whose per-step footprint fits the VMEM budget."""
    b_pack = _round_up(batch, pack)
    if b_pack <= 256:
        tms = [b_pack]                               # single (or near-single) tile
    else:
        tms = [t for t in (1024, 512, 256) if t <= b_pack] or [256]
    tks = _divisor_tiles(in_p)
    tns = _divisor_tiles(out_p)
    headroom = 4 * _MIB                              # compiler scratch / semaphores
    for tm in tms:
        for tn in tns:
            for tk in tks:
                num_i = _round_up(batch, tm) // tm
                num_j = out_p // tn
                num_k = in_p // tk
                est = _estimate_vmem(tm, tk, tn, h_p, itm, out_itm,
                                     num_i, num_j, num_k)
                if est + headroom <= budget:
                    return tm, tk, tn
    return tms[-1], tks[-1], tns[-1]                 # smallest; let compiler decide


def _mlp_kernel(x_ref, w1_ref, b1_ref, w2_ref, b2_ref, o_ref, h_acc):
    """out = ReLU(x @ w1.T + b1) @ w2.T + b2, with K-tiled fc1 accumulation."""
    k = pl.program_id(2)

    @pl.when(k == 0)
    def _():
        h_acc[...] = jnp.zeros_like(h_acc)

    # fc1 partial product: (TM, TK) x (H, TK) -> (TM, H), f32 accumulate on MXU.
    h_acc[...] += lax.dot_general(
        x_ref[...],
        w1_ref[...],
        dimension_numbers=(((1,), (1,)), ((), ())),
        preferred_element_type=jnp.float32,
    )

    @pl.when(k == pl.num_programs(2) - 1)
    def _():
        # Bias + ReLU in f32 on the VPU, then fc2 on the MXU.
        h = jnp.maximum(h_acc[...] + b1_ref[...], 0.0)
        out = lax.dot_general(
            h.astype(w2_ref.dtype),
            w2_ref[...],
            dimension_numbers=(((1,), (1,)), ((), ())),
            preferred_element_type=jnp.float32,
        )
        o_ref[...] = (out + b2_ref[...]).astype(o_ref.dtype)


def prepare_params(w1, b1, w2, b2, *, compute_dtype=jnp.bfloat16):
    """Pad + cast the call-invariant weights ONCE; reuse across forward calls.

    PyTorch nn.Linear layout: weight = (out_features, in_features).
    Returns (w1_p, b1_p, w2_p, b2_p) with every minor dim a multiple of 128.
    """
    H, In = w1.shape
    Out, H2 = w2.shape
    assert H2 == H and b1.shape == (H,) and b2.shape == (Out,)
    cdt = jnp.dtype(compute_dtype)
    In_p, H_p, Out_p = (_round_up(d, _LANE) for d in (In, H, Out))
    w1_p = jnp.pad(w1.astype(cdt), ((0, H_p - H), (0, In_p - In)))
    w2_p = jnp.pad(w2.astype(cdt), ((0, Out_p - Out), (0, H_p - H)))
    b1_p = jnp.pad(b1.astype(jnp.float32), (0, H_p - H)).reshape(1, H_p)
    b2_p = jnp.pad(b2.astype(jnp.float32), (0, Out_p - Out)).reshape(1, Out_p)
    return w1_p, b1_p, w2_p, b2_p


@functools.partial(jax.jit, static_argnames=("out_features", "out_dtype"))
def two_layers_nn(x, w1_p, b1_p, w2_p, b2_p, *, out_features,
                  out_dtype=jnp.float32):
    """Fused two-layer MLP forward pass on pre-padded params.

    x: (B, In); params from prepare_params(). Returns (B, out_features).
    """
    B, In = x.shape
    H_p, In_p = w1_p.shape
    Out_p, H_p2 = w2_p.shape
    assert H_p2 == H_p and In <= In_p and out_features <= Out_p

    cdt = w1_p.dtype
    itm = jnp.dtype(cdt).itemsize
    out_dt = jnp.dtype(out_dtype)
    out_itm = out_dt.itemsize
    pack = max(8, 32 // itm)          # sublane pack: 8 f32, 16 bf16, 32 int8/fp8

    budget = _vmem_budget_bytes()
    TM, TK, TN = _select_tiles(B, In_p, H_p, Out_p, itm, out_itm, pack, budget)

    B_p = _round_up(B, TM)
    num_i = B_p // TM

    # If there is only one batch tile, split Out so the second "parallel" axis
    # gives v7x's second TensorCore work (and shrinks w2 residency per step).
    if num_i == 1 and TN == Out_p and Out_p >= 2 * _LANE:
        smaller = [t for t in _divisor_tiles(Out_p) if t <= Out_p // 2]
        if smaller:
            TN = smaller[0]

    num_j = Out_p // TN
    num_k = In_p // TK

    # Pad/cast x only when necessary (skipped entirely for aligned inputs).
    if B_p == B and In_p == In and x.dtype == cdt:
        x_p = x
    else:
        x_p = jnp.pad(x.astype(cdt), ((0, B_p - B), (0, In_p - In)))

    def _in_spec(shape, index_map, single_buffer):
        if single_buffer:
            try:
                return pl.BlockSpec(shape, index_map, pipeline_mode=pl.Buffered(1))
            except TypeError:   # older BlockSpec signature: fall back to default
                pass
        return pl.BlockSpec(shape, index_map)

    in_specs = [
        _in_spec((TM, TK), lambda i, j, k: (i, k), num_i == 1 and num_k == 1),  # x
        _in_spec((H_p, TK), lambda i, j, k: (0, k), num_k == 1),                # w1
        _in_spec((1, H_p), lambda i, j, k: (0, 0), True),                       # b1
        _in_spec((TN, H_p), lambda i, j, k: (j, 0), num_j == 1),                # w2
        _in_spec((1, TN), lambda i, j, k: (0, j), num_j == 1),                  # b2
    ]

    grid_spec = pltpu.PrefetchScalarGridSpec(
        num_scalar_prefetch=0,
        grid=(num_i, num_j, num_k),
        in_specs=in_specs,
        out_specs=pl.BlockSpec((TM, TN), lambda i, j, k: (i, j)),
        scratch_shapes=[pltpu.VMEM((TM, H_p), jnp.float32)],
    )

    flops = 2 * B_p * In_p * H_p + 2 * B_p * H_p * Out_p
    bytes_accessed = (B_p * In_p * itm + H_p * In_p * itm + Out_p * H_p * itm
                      + (H_p + Out_p) * 4 + B_p * Out_p * out_itm)

    out_p = pl.pallas_call(
        _mlp_kernel,
        out_shape=jax.ShapeDtypeStruct((B_p, Out_p), out_dt),
        grid_spec=grid_spec,
        compiler_params=pltpu.CompilerParams(
            dimension_semantics=("parallel", "parallel", "arbitrary"),
            vmem_limit_bytes=budget,
        ),
        cost_estimate=pl.CostEstimate(
            flops=flops, transcendentals=0, bytes_accessed=bytes_accessed),
    )(x_p, w1_p, b1_p, w2_p, b2_p)

    return out_p[:B, :out_features]


def _init_linear(key, out_features, in_features):
    """Deterministic PyTorch-like init: U(-1/sqrt(fan_in), 1/sqrt(fan_in))."""
    kw, kb = jax.random.split(key)
    bound = 1.0 / jnp.sqrt(jnp.float32(in_features))
    w = jax.random.uniform(kw, (out_features, in_features), jnp.float32, -bound, bound)
    b = jax.random.uniform(kb, (out_features,), jnp.float32, -bound, bound)
    return w, b


if __name__ == "__main__":
    key = jax.random.PRNGKey(0)
    k_x, k_fc1, k_fc2 = jax.random.split(key, 3)

    batch = 8
    input_size = 32
    output_size = 16

    x = jax.random.normal(k_x, (batch, input_size), jnp.float32)
    w1, b1 = _init_linear(k_fc1, input_size, input_size)   # fc1: In -> In
    w2, b2 = _init_linear(k_fc2, output_size, input_size)  # fc2: In -> Out

    # Pure-JAX f32 reference (module itself is f64; TPU has no f64 MXU path).
    ref = jnp.maximum(x @ w1.T + b1, 0.0) @ w2.T + b2

    # f32 MXU path (tight correctness check); params padded/cast once.
    p32 = prepare_params(w1, b1, w2, b2, compute_dtype=jnp.float32)
    out_f32 = jax.block_until_ready(
        two_layers_nn(x, *p32, out_features=output_size))
    assert out_f32.shape == (batch, output_size)
    assert jnp.allclose(out_f32, ref, atol=1e-5, rtol=1e-5)

    # bf16-in / f32-accumulate fast path (default deployment path).
    pbf = prepare_params(w1, b1, w2, b2, compute_dtype=jnp.bfloat16)
    out_bf16 = jax.block_until_ready(
        two_layers_nn(x, *pbf, out_features=output_size))
    assert out_bf16.shape == (batch, output_size)
    assert jnp.allclose(out_bf16, ref, atol=5e-2, rtol=5e-2)

    print("KERNEL_OK")
</pallas_src>

<mosaic_0001>
module attributes {stable_mosaic.version = 11 : i64} {
  func.func @_mlp_kernel(%arg0: i32, %arg1: i32, %arg2: i32, %arg3: memref<8x128xf32, #tpu.memory_space<vmem>>, %arg4: memref<128x128xf32, #tpu.memory_space<vmem>>, %arg5: memref<1x128xf32, #tpu.memory_space<vmem>>, %arg6: memref<128x128xf32, #tpu.memory_space<vmem>>, %arg7: memref<1x128xf32, #tpu.memory_space<vmem>>, %arg8: memref<8x128xf32, #tpu.memory_space<vmem>>, %arg9: memref<8x128xf32, #tpu.memory_space<vmem>>) attributes {dimension_semantics = [#tpu.dimension_semantics<parallel>, #tpu.dimension_semantics<parallel>, #tpu.dimension_semantics<arbitrary>], iteration_bounds = array<i64: 1, 1, 1>, scalar_prefetch = 0 : i64, scratch_operands = 1 : i64, tpu.core_type = #tpu.core_type<tc>, window_params = [{pipeline_mode = #tpu.pipeline_mode<synchronous>, transform_indices = @transform_0, window_bounds = array<i64: 8, 128>}, {pipeline_mode = #tpu.pipeline_mode<synchronous>, transform_indices = @transform_1, window_bounds = array<i64: 128, 128>}, {pipeline_mode = #tpu.pipeline_mode<synchronous>, transform_indices = @transform_2, window_bounds = array<i64: 1, 128>}, {pipeline_mode = #tpu.pipeline_mode<synchronous>, transform_indices = @transform_3, window_bounds = array<i64: 128, 128>}, {pipeline_mode = #tpu.pipeline_mode<synchronous>, transform_indices = @transform_4, window_bounds = array<i64: 1, 128>}, {transform_indices = @transform_5, window_bounds = array<i64: 8, 128>}]} {
    %c0_i32 = arith.constant 0 : i32
    %0 = arith.cmpi eq, %arg2, %c0_i32 : i32
    %1 = arith.extui %0 : i1 to i32
    %c0_i32_0 = arith.constant 0 : i32
    %2 = arith.cmpi ne, %1, %c0_i32_0 : i32
    scf.if %2 {
      %cst_10 = arith.constant 0.000000e+00 : f32
      %12 = vector.broadcast %cst_10 : f32 to vector<8x128xf32>
      %c0_11 = arith.constant 0 : index
      %c0_12 = arith.constant 0 : index
      %13 = vector.load %arg9[%c0_11, %c0_12] : memref<8x128xf32, #tpu.memory_space<vmem>>, vector<8x128xf32>
      tpu.vector_store %arg9[%c0_11, %c0_12], %12 {strides = array<i32>} : memref<8x128xf32, #tpu.memory_space<vmem>>, vector<8x128xf32>,
    } else {
    }
    %c0 = arith.constant 0 : index
    %c0_1 = arith.constant 0 : index
    %3 = vector.load %arg9[%c0, %c0_1] : memref<8x128xf32, #tpu.memory_space<vmem>>, vector<8x128xf32>
    %c0_2 = arith.constant 0 : index
    %c0_3 = arith.constant 0 : index
    %4 = vector.load %arg3[%c0_2, %c0_3] : memref<8x128xf32, #tpu.memory_space<vmem>>, vector<8x128xf32>
    %c0_4 = arith.constant 0 : index
    %c0_5 = arith.constant 0 : index
    %5 = vector.load %arg4[%c0_4, %c0_5] : memref<128x128xf32, #tpu.memory_space<vmem>>, vector<128x128xf32>
    %cst = arith.constant dense<0.000000e+00> : vector<8x128xf32>
    %6 = tpu.matmul %4, %5, %cst {dimension_numbers = #tpu.dot_dimension_numbers<[1], [1], [0], [0], [0, 0, 1, 0], [], []>} : vector<8x128xf32>, vector<128x128xf32>, vector<8x128xf32> -> vector<8x128xf32>
    %7 = arith.addf %3, %6 : vector<8x128xf32>
    %c0_6 = arith.constant 0 : index
    %c0_7 = arith.constant 0 : index
    %8 = vector.load %arg9[%c0_6, %c0_7] : memref<8x128xf32, #tpu.memory_space<vmem>>, vector<8x128xf32>
    tpu.vector_store %arg9[%c0_6, %c0_7], %7 {strides = array<i32>} : memref<8x128xf32, #tpu.memory_space<vmem>>, vector<8x128xf32>,
    %c0_i32_8 = arith.constant 0 : i32
    %9 = arith.cmpi eq, %arg2, %c0_i32_8 : i32
    %10 = arith.extui %9 : i1 to i32
    %c0_i32_9 = arith.constant 0 : i32
    %11 = arith.cmpi ne, %10, %c0_i32_9 : i32
    scf.if %11 {
      %c0_10 = arith.constant 0 : index
      %c0_11 = arith.constant 0 : index
      %12 = vector.load %arg9[%c0_10, %c0_11] : memref<8x128xf32, #tpu.memory_space<vmem>>, vector<8x128xf32>
      %c0_12 = arith.constant 0 : index
      %c0_13 = arith.constant 0 : index
      %13 = vector.load %arg5[%c0_12, %c0_13] : memref<1x128xf32, #tpu.memory_space<vmem>>, vector<1x128xf32>
      %14 = vector.broadcast %13 : vector<1x128xf32> to vector<8x128xf32>
      %15 = arith.addf %12, %14 : vector<8x128xf32>
      %cst_14 = arith.constant 0.000000e+00 : f32
      %16 = vector.broadcast %cst_14 : f32 to vector<8x128xf32>
      %17 = arith.maximumf %15, %16 : vector<8x128xf32>
      %c0_15 = arith.constant 0 : index
      %c0_16 = arith.constant 0 : index
      %18 = vector.load %arg6[%c0_15, %c0_16] : memref<128x128xf32, #tpu.memory_space<vmem>>, vector<128x128xf32>
      %cst_17 = arith.constant dense<0.000000e+00> : vector<8x128xf32>
      %19 = tpu.matmul %17, %18, %cst_17 {dimension_numbers = #tpu.dot_dimension_numbers<[1], [1], [0], [0], [0, 0, 1, 0], [], []>} : vector<8x128xf32>, vector<128x128xf32>, vector<8x128xf32> -> vector<8x128xf32>
      %c0_18 = arith.constant 0 : index
      %c0_19 = arith.constant 0 : index
      %20 = vector.load %arg7[%c0_18, %c0_19] : memref<1x128xf32, #tpu.memory_space<vmem>>, vector<1x128xf32>
      %21 = vector.broadcast %20 : vector<1x128xf32> to vector<8x128xf32>
      %22 = arith.addf %19, %21 : vector<8x128xf32>
      %c0_20 = arith.constant 0 : index
      %c0_21 = arith.constant 0 : index
      %23 = vector.load %arg8[%c0_20, %c0_21] : memref<8x128xf32, #tpu.memory_space<vmem>>, vector<8x128xf32>
      tpu.vector_store %arg8[%c0_20, %c0_21], %22 {strides = array<i32>} : memref<8x128xf32, #tpu.memory_space<vmem>>, vector<8x128xf32>,
    } else {
    }
    return
  }
  func.func @transform_0(%arg0: i32, %arg1: i32, %arg2: i32) -> (i32, i32) {
    %c0_i32 = arith.constant 0 : i32
    return %arg0, %arg2 : i32, i32
  }
  func.func @transform_1(%arg0: i32, %arg1: i32, %arg2: i32) -> (i32, i32) {
    %c0_i32 = arith.constant 0 : i32
    %c0_i32_0 = arith.constant 0 : i32
    return %c0_i32, %arg2 : i32, i32
  }
  func.func @transform_2(%arg0: i32, %arg1: i32, %arg2: i32) -> (i32, i32) {
    %c0_i32 = arith.constant 0 : i32
    %c0_i32_0 = arith.constant 0 : i32
    %c0_i32_1 = arith.constant 0 : i32
    return %c0_i32, %c0_i32_0 : i32, i32
  }
  func.func @transform_3(%arg0: i32, %arg1: i32, %arg2: i32) -> (i32, i32) {
    %c0_i32 = arith.constant 0 : i32
    %c0_i32_0 = arith.constant 0 : i32
    return %arg1, %c0_i32 : i32, i32
  }
  func.func @transform_4(%arg0: i32, %arg1: i32, %arg2: i32) -> (i32, i32) {
    %c0_i32 = arith.constant 0 : i32
    %c0_i32_0 = arith.constant 0 : i32
    return %c0_i32, %arg1 : i32, i32
  }
  func.func @transform_5(%arg0: i32, %arg1: i32, %arg2: i32) -> (i32, i32) {
    %c0_i32 = arith.constant 0 : i32
    return %arg0, %arg1 : i32, i32
  }
}

</mosaic_0001>

<llo_original>
// kernel: two_layers_nn.1
$region0: #{two_layers_nn.1}
  #allocation0 [shape = 'u32[]', space=smem, size = 0x4, offset = 0x4, fixed_abs, tag = 'smem constant byte address 0x4 - core index']
  #allocation1 [shape = 'u32[72,128]{1,0:T(1,128)}', space=vmem, size = 0x9000, scoped, tag = 'internal scratch']
  #allocation2 [shape = 'f32[8,128]{1,0:T(8,128)}', space=vmem, size = 0x1000, scoped, tag = 'scratch operand']
  %s0 = inlined_call_operand.vmem [shape: f32[8,128], index: 0, kind: input, shape index: {}]
  %s1 = inlined_call_operand.hbm [shape: f32[128,128], index: 1, kind: input, shape index: {}]
  %s2 = inlined_call_operand.vmem [shape: f32[1,128], index: 2, kind: input, shape index: {}]
  %s3 = inlined_call_operand.hbm [shape: f32[128,128], index: 3, kind: input, shape index: {}]
  %s4 = inlined_call_operand.vmem [shape: f32[1,128], index: 4, kind: input, shape index: {}]
  %s5 = inlined_call_operand.hbm [shape: f32[8,128], index: 5, kind: output, shape index: {}]
  %s6 = sld [smem:[#allocation0]]
  $region46: #{two_layers_nn.1} parent=0
    _
  %s8 = ssub.s32 1, %s6
  %s9 = scalar_select 0, %s8, %s6
  $region1: #{two_layers_nn.1} parent=0
    #allocation3 [shape = 'u8[65536]{0}', space=vmem, size = 0x10000, scoped, tag = 'input window, operand 1, single buffered']
    #allocation4 [shape = 's32[1]{0}', space=sflag, size = 0x4, scoped, tag = 'scoped memory for two_layers_nn.1']
    #allocation5 [shape = 's32[1]{0}', space=sflag, size = 0x4, scoped, tag = 'scoped memory for two_layers_nn.1']
    #allocation6 [shape = 'u8[65536]{0}', space=vmem, size = 0x10000, scoped, tag = 'input window, operand 3, single buffered']
    #allocation7 [shape = 's32[1]{0}', space=sflag, size = 0x4, scoped, tag = 'scoped memory for two_layers_nn.1']
    #allocation8 [shape = 'u8[4096]{0}', space=vmem, size = 0x1000, scoped, tag = 'output window, operand 0, single buffered']
    %10 = vsyncpa [#allocation4], 0
    %11 = vsyncpa [#allocation7], 0
    %12 = vsyncpa [#allocation5], 0
    // Predicated region
    $region2: #{two_layers_nn.1} parent=1 // pred_check
      _
    $region3: #{two_layers_nn.1} parent=1 // pred_check_branch
      %14 = sbr.rel (0) target = $region5
    $region4: #{two_layers_nn.1} parent=1 // pred_region
      _
    $region5: #{two_layers_nn.1} parent=1 // pred_fallthru
      _
    // Predicated region
    $region6: #{two_layers_nn.1} parent=1 // pred_check
      _
    $region7: #{two_layers_nn.1} parent=1 // pred_check_branch
      %16 = sbr.rel (0) target = $region9
    $region8: #{two_layers_nn.1} parent=1 // pred_region
      %18 = vsyncadd [#allocation4], 0
      %s19 = sshll.u32 %s1, 4
      %s20 = int_to_ptr.hbm [resolvable:$true] %s19
      %s21 = sshll.u32 [#allocation3], 4
      %s22 = int_to_ptr.vmem [resolvable:$true] %s21
      %27 = dma.hbm_to_vmem [thread:$0]  %s20, 2048, %s22, [#allocation4], 128, 128, 8
    $region9: #{two_layers_nn.1} parent=1 // pred_fallthru
      _
    // Predicated region
    $region10: #{two_layers_nn.1} parent=1 // pred_check
      _
    $region11: #{two_layers_nn.1} parent=1 // pred_check_branch
      %29 = sbr.rel (0) target = $region13
    $region12: #{two_layers_nn.1} parent=1 // pred_region
      _
    $region13: #{two_layers_nn.1} parent=1 // pred_fallthru
      _
    // Predicated region
    $region14: #{two_layers_nn.1} parent=1 // pred_check
      _
    $region15: #{two_layers_nn.1} parent=1 // pred_check_branch
      %31 = sbr.rel (0) target = $region17
    $region16: #{two_layers_nn.1} parent=1 // pred_region
      %33 = vsyncadd [#allocation7], 0
      %s34 = sshll.u32 %s3, 4
      %s35 = int_to_ptr.hbm [resolvable:$true] %s34
      %s36 = sshll.u32 [#allocation6], 4
      %s37 = int_to_ptr.vmem [resolvable:$true] %s36
      %42 = dma.hbm_to_vmem [thread:$0]  %s35, 2048, %s37, [#allocation7], 128, 128, 8
    $region17: #{two_layers_nn.1} parent=1 // pred_fallthru
      _
    // Predicated region
    $region18: #{two_layers_nn.1} parent=1 // pred_check
      _
    $region19: #{two_layers_nn.1} parent=1 // pred_check_branch
      %44 = sbr.rel (0) target = $region21
    $region20: #{two_layers_nn.1} parent=1 // pred_region
      _
    $region21: #{two_layers_nn.1} parent=1 // pred_fallthru
      _
    // Predicated region
    $region22: #{two_layers_nn.1} parent=1 // pred_check
      _
    $region23: #{two_layers_nn.1} parent=1 // pred_check_branch
      %46 = sbr.rel (0) target = $region25
    $region24: #{two_layers_nn.1} parent=1 // pred_region
      %48 = dma.done [#allocation4], 2048
    $region25: #{two_layers_nn.1} parent=1 // pred_fallthru
      _
    // Predicated region
    $region26: #{two_layers_nn.1} parent=1 // pred_check
      _
    $region27: #{two_layers_nn.1} parent=1 // pred_check_branch
      %50 = sbr.rel (0) target = $region29
    $region28: #{two_layers_nn.1} parent=1 // pred_region
      %52 = dma.done [#allocation7], 2048
    $region29: #{two_layers_nn.1} parent=1 // pred_fallthru
      _
    %p53 = scmp.eq.s32.totalorder 0, 0
    // Predicated region
    $region30: #{two_layers_nn.1} parent=1 // pred_check
      %p54 = pneg %p53
    $region31: #{two_layers_nn.1} parent=1 // pred_check_branch
      %56 = sbr.rel (%p54) target = $region33
    $region32: #{two_layers_nn.1} parent=1 // pred_region
      %57 = vst [vmem:[#allocation2] sm:$0xff] 0.0
    $region33: #{two_layers_nn.1} parent=1 // pred_fallthru
      _
    %v58 = vld [vmem:[#allocation2] sm:$0xff]
    %v59 = vld [vmem:[%s0] sm:$0xff]
    %v60 = vld [vmem:[#allocation3] sm:$0xff]
    %v61 = vld [vmem:[#allocation3 + $0x8] sm:$0xff]
    %v62 = vld [vmem:[#allocation3 + $0x10] sm:$0xff]
    %v63 = vld [vmem:[#allocation3 + $0x18] sm:$0xff]
    %v64 = vld [vmem:[#allocation3 + $0x20] sm:$0xff]
    %v65 = vld [vmem:[#allocation3 + $0x28] sm:$0xff]
    %v66 = vld [vmem:[#allocation3 + $0x30] sm:$0xff]
    %v67 = vld [vmem:[#allocation3 + $0x38] sm:$0xff]
    %v68 = vld [vmem:[#allocation3 + $0x40] sm:$0xff]
    %v69 = vld [vmem:[#allocation3 + $0x48] sm:$0xff]
    %v70 = vld [vmem:[#allocation3 + $0x50] sm:$0xff]
    %v71 = vld [vmem:[#allocation3 + $0x58] sm:$0xff]
    %v72 = vld [vmem:[#allocation3 + $0x60] sm:$0xff]
    %v73 = vld [vmem:[#allocation3 + $0x68] sm:$0xff]
    %v74 = vld [vmem:[#allocation3 + $0x70] sm:$0xff]
    %v75 = vld [vmem:[#allocation3 + $0x78] sm:$0xff]
    %76 = vmatpush.xpose.msra.mxu0 %v75
    %77 = vmatpush.xpose.msra.mxu0 %v74
    %78 = vmatpush.xpose.msra.mxu0 %v73
    %79 = vmatpush.xpose.msra.mxu0 %v72
    %80 = vmatpush.xpose.msra.mxu0 %v71
    %81 = vmatpush.xpose.msra.mxu0 %v70
    %82 = vmatpush.xpose.msra.mxu0 %v69
    %83 = vmatpush.xpose.msra.mxu0 %v68
    %84 = vmatpush.xpose.msra.mxu0 %v67
    %85 = vmatpush.xpose.msra.mxu0 %v66
    %86 = vmatpush.xpose.msra.mxu0 %v65
    %87 = vmatpush.xpose.msra.mxu0 %v64
    %88 = vmatpush.xpose.msra.mxu0 %v63
    %89 = vmatpush.xpose.msra.mxu0 %v62
    %90 = vmatpush.xpose.msra.mxu0 %v61
    %91 = vmatpush.xpose.msra.mxu0 %v60
    %92 = vmatmul.f32.gmra.mxu0 %v59
    %v93 = vpop.f32.mrf.mxu0
    %v94 = vadd.f32 0.0, %v93
    %95 = vdwg.mxu0
    %v96 = vadd.f32 %v58, %v94
    %97 = vst [vmem:[#allocation2] sm:$0xff] %v96
    // Predicated region
    $region34: #{two_layers_nn.1} parent=1 // pred_check
      %p98 = pneg %p53
    $region35: #{two_layers_nn.1} parent=1 // pred_check_branch
      %100 = sbr.rel (%p98) target = $region37
    $region36: #{two_layers_nn.1} parent=1 // pred_region
      %v101 = vld [vmem:[#allocation2] sm:$0xff]
      %v102 = vld [vmem:[%s2] sm:$0x1]
      %v104 = vperm.slane %v102, 0
      %v106 = vadd.f32 %v101, %v104
      %v107 = vmax.f32 %v106, 0.0
      %v108 = vld [vmem:[#allocation6] sm:$0xff]
      %v109 = vld [vmem:[#allocation6 + $0x8] sm:$0xff]
      %v110 = vld [vmem:[#allocation6 + $0x10] sm:$0xff]
      %v111 = vld [vmem:[#allocation6 + $0x18] sm:$0xff]
      %v112 = vld [vmem:[#allocation6 + $0x20] sm:$0xff]
      %v113 = vld [vmem:[#allocation6 + $0x28] sm:$0xff]
      %v114 = vld [vmem:[#allocation6 + $0x30] sm:$0xff]
      %v115 = vld [vmem:[#allocation6 + $0x38] sm:$0xff]
      %v116 = vld [vmem:[#allocation6 + $0x40] sm:$0xff]
      %v117 = vld [vmem:[#allocation6 + $0x48] sm:$0xff]
      %v118 = vld [vmem:[#allocation6 + $0x50] sm:$0xff]
      %v119 = vld [vmem:[#allocation6 + $0x58] sm:$0xff]
      %v120 = vld [vmem:[#allocation6 + $0x60] sm:$0xff]
      %v121 = vld [vmem:[#allocation6 + $0x68] sm:$0xff]
      %v122 = vld [vmem:[#allocation6 + $0x70] sm:$0xff]
      %v123 = vld [vmem:[#allocation6 + $0x78] sm:$0xff]
      %v124 = vld [vmem:[%s4] sm:$0x1]
      %v126 = vperm.slane %v124, 0
      %128 = vmatpush.xpose.msra.mxu0 %v123
      %129 = vmatpush.xpose.msra.mxu0 %v122
      %130 = vmatpush.xpose.msra.mxu0 %v121
      %131 = vmatpush.xpose.msra.mxu0 %v120
      %132 = vmatpush.xpose.msra.mxu0 %v119
      %133 = vmatpush.xpose.msra.mxu0 %v118
      %134 = vmatpush.xpose.msra.mxu0 %v117
      %135 = vmatpush.xpose.msra.mxu0 %v116
      %136 = vmatpush.xpose.msra.mxu0 %v115
      %137 = vmatpush.xpose.msra.mxu0 %v114
      %138 = vmatpush.xpose.msra.mxu0 %v113
      %139 = vmatpush.xpose.msra.mxu0 %v112
      %140 = vmatpush.xpose.msra.mxu0 %v111
      %141 = vmatpush.xpose.msra.mxu0 %v110
      %142 = vmatpush.xpose.msra.mxu0 %v109
      %143 = vmatpush.xpose.msra.mxu0 %v108
      %144 = vmatmul.f32.gmra.mxu0 %v107
      %v145 = vpop.f32.mrf.mxu0
      %v146 = vadd.f32 %v126, %v145
      %147 = vdwg.mxu0
      %148 = vst [vmem:[#allocation8] sm:$0xff] %v146
    $region37: #{two_layers_nn.1} parent=1 // pred_fallthru
      _
    // Predicated region
    $region38: #{two_layers_nn.1} parent=1 // pred_check
      _
    $region39: #{two_layers_nn.1} parent=1 // pred_check_branch
      %150 = sbr.rel (0) target = $region41
    $region40: #{two_layers_nn.1} parent=1 // pred_region
      %152 = vsyncadd [#allocation5], 0
      %s154 = sshll.u32 [#allocation8], 4
      %s155 = int_to_ptr.vmem [resolvable:$true] %s154
      %s156 = sshll.u32 %s5, 4
      %s157 = int_to_ptr.hbm [resolvable:$true] %s156
      %159 = dma.vmem_to_hbm [thread:$0]  %s155, 128, %s157, [#allocation5]
    $region41: #{two_layers_nn.1} parent=1 // pred_fallthru
      _
    // Predicated region
    $region42: #{two_layers_nn.1} parent=1 // pred_check
      _
    $region43: #{two_layers_nn.1} parent=1 // pred_check_branch
      %161 = sbr.rel (0) target = $region45
    $region44: #{two_layers_nn.1} parent=1 // pred_region
      %163 = dma.done [#allocation5], 128
    $region45: #{two_layers_nn.1} parent=1 // pred_fallthru
      _
    %164 = vsyncpa [#allocation4], 1
    %165 = vsyncpa [#allocation7], 1
    %166 = vsyncpa [#allocation5], 1

</llo_original>
